<compile_context>
chip_gen: v7x
topology: tpu7x:2x2x1
jax: 0.10.0
libtpu: 0.0.40
codegen_flags: <defaults>
</compile_context>

<pallas_src>
import functools

import jax
import jax.numpy as jnp
from jax.experimental import pallas as pl
from jax.experimental.pallas import tpu as pltpu

LANE = 128
SUBLANE = 8


def _round_up(n, m):
    return ((n + m - 1) // m) * m


# ----------------------------------------------------------------------------
# Pallas kernel: ALL TopoTune layers fused.
#   per layer l:  X <- relu( A @ (X W_l) + (X W_l) + b_l )
# ----------------------------------------------------------------------------
def _topotune_fused_kernel(a_ref, x_ref, w_ref, b_ref, o_ref, *, layers):
    a = a_ref[...]                      # (Np, Np)  bf16, layer-invariant
    x = x_ref[...]                      # (Np, Cp)  f32
    for layer in range(layers):         # small, statically unrolled
        w = w_ref[layer]                # (Cp, Cp)  bf16
        b = b_ref[layer]                # (1,  Cp)  f32
        xw = jnp.dot(x.astype(jnp.bfloat16), w,
                     preferred_element_type=jnp.float32)
        msg = jnp.dot(a, xw.astype(jnp.bfloat16),
                      preferred_element_type=jnp.float32)
        # "+ xw" = folded-in self loop; bias + relu kept in f32 (VPU).
        x = jnp.maximum(msg + xw + b, 0.0)
    o_ref[...] = x


def _topotune_fused_call(a, x, w, b, layers):
    n_pad, c_pad = x.shape
    return pl.pallas_call(
        functools.partial(_topotune_fused_kernel, layers=layers),
        out_shape=jax.ShapeDtypeStruct((n_pad, c_pad), jnp.float32),
        in_specs=[pl.BlockSpec(memory_space=pltpu.MemorySpace.VMEM)] * 4,
        out_specs=pl.BlockSpec(memory_space=pltpu.MemorySpace.VMEM),
    )(a, x, w, b)


# ----------------------------------------------------------------------------
# Glue: Hasse-graph expansion (all_nbhds_expand), padding, per-rank split.
# ----------------------------------------------------------------------------
def build_hasse_edge_index(b1_idx, b2_idx, n0, n1):
    """Concatenate neighborhood relations with rank offsets (all_nbhds_expand,
    incidence / co-incidence routes)."""
    node, edge = b1_idx          # B1 indices: (node, edge)
    edgef, face = b2_idx         # B2 indices: (edge, face)
    eis = []
    # down_incidence-1 (src_rank=1): adjustment [[0],[n0]]      node -> edge-cell
    eis.append(jnp.stack([node, edge + n0]))
    # up_incidence-0  (src_rank=0): adjustment [[n0],[0]]       edge-cell -> node
    eis.append(jnp.stack([edge + n0, node]))
    # down_incidence-2 (src_rank=2): adjustment [[n0],[n0+n1]]  edge -> face
    eis.append(jnp.stack([edgef + n0, face + n0 + n1]))
    # up_incidence-1  (src_rank=1): adjustment [[n0+n1],[n0]]   face -> edge
    eis.append(jnp.stack([face + n0 + n1, edgef + n0]))
    return jnp.concatenate(eis, axis=1)


def _prepare_operands(x0, x1, x2, edge_index, weights, biases):
    """Concatenate / pad everything into lane-dense, MXU-friendly operands."""
    n0, n1, n2 = x0.shape[0], x1.shape[0], x2.shape[0]
    n_total = n0 + n1 + n2
    hidden = x0.shape[1]
    layers = weights.shape[0]

    n_pad = _round_up(n_total, SUBLANE)
    c_pad = _round_up(max(hidden, LANE), LANE)

    # Concatenated Hasse-graph features, padded lane-dense (C -> 128 lanes).
    x = jnp.concatenate([x0, x1, x2], axis=0).astype(jnp.float32)
    x = jnp.pad(x, ((0, n_pad - n_total), (0, c_pad - hidden)))

    # Dense adjacency A[dst, src] = edge multiplicity.  NO self loops here:
    # they are folded into the kernel as "+ XW".  Small ints -> exact in bf16.
    src, dst = edge_index[0], edge_index[1]
    a = jnp.zeros((n_pad, n_pad), jnp.float32).at[dst, src].add(1.0)
    a = a.astype(jnp.bfloat16)

    w = jnp.pad(weights.astype(jnp.float32),
                ((0, 0), (0, c_pad - hidden), (0, c_pad - hidden)))
    w = w.astype(jnp.bfloat16)
    b = jnp.pad(biases.astype(jnp.float32),
                ((0, 0), (0, 0), (0, c_pad - hidden)))
    return a, x, w, b, (n0, n1, n2, hidden, layers)


def topotune_onehasse_forward(x0, x1, x2, edge_index, weights, biases):
    """Forward pass of TopoTune_OneHasse. Returns dict rank -> features."""
    if x2.shape[0] == 0:            # static-shape early exit, as in the module
        return {0: x0, 1: x1, 2: x2}

    a, x, w, b, (n0, n1, n2, hidden, layers) = _prepare_operands(
        x0, x1, x2, edge_index, weights, biases)
    y = _topotune_fused_call(a, x, w, b, layers)
    y = y[: n0 + n1 + n2, :hidden]

    # aggregate_inter_nbhd: slice back per rank (membership sizes n0,n1,n2)
    return {0: y[:n0], 1: y[n0:n0 + n1], 2: y[n0 + n1:]}


# Pure-JAX reference with the same precision choices (kernel correctness check)
def _reference_forward(a, x, w, b, layers):
    for layer in range(layers):
        xw = jnp.dot(x.astype(jnp.bfloat16), w[layer],
                     preferred_element_type=jnp.float32)
        msg = jnp.dot(a, xw.astype(jnp.bfloat16),
                      preferred_element_type=jnp.float32)
        x = jnp.maximum(msg + xw + b[layer], 0.0)
    return x


# ----------------------------------------------------------------------------
# Main: deterministic synthetic inputs + parameters.
# ----------------------------------------------------------------------------
if __name__ == "__main__":
    key = jax.random.PRNGKey(0)
    k_x0, k_x1, k_x2, k_b1u, k_b1v, k_b2, k_w, k_b = jax.random.split(key, 8)

    # Batch of 2 graphs (cell_statistics): graph0 = (10,15,5), graph1 = (6,9,3)
    n0, n1, n2 = 10 + 6, 15 + 9, 5 + 3          # 16 nodes, 24 edges, 8 faces
    hidden = 32                                  # GNN.hidden_channels == out_channels
    layers = 2

    x0 = jax.random.normal(k_x0, (n0, hidden), dtype=jnp.float32)
    x1 = jax.random.normal(k_x1, (n1, hidden), dtype=jnp.float32)
    x2 = jax.random.normal(k_x2, (n2, hidden), dtype=jnp.float32)

    # Sparse incidence structure (deterministic):
    #   B1: each edge touches 2 nodes; B2: each face touches 3 edges.
    e_u = jax.random.randint(k_b1u, (n1,), 0, n0)
    e_v = (e_u + 1 + jax.random.randint(k_b1v, (n1,), 0, n0 - 1)) % n0
    b1_idx = (jnp.concatenate([e_u, e_v]),
              jnp.concatenate([jnp.arange(n1), jnp.arange(n1)]))
    f_edges = jax.random.randint(k_b2, (n2, 3), 0, n1)
    b2_idx = (f_edges.reshape(-1),
              jnp.repeat(jnp.arange(n2), 3))

    edge_index = build_hasse_edge_index(b1_idx, b2_idx, n0, n1)

    # Deterministic GNN parameters.  graph_routes = deep copies of one GNN,
    # so all TopoTune layers share identical initial values (still stacked
    # per layer to preserve the per-layer-weights structure of the module).
    w0 = (jax.random.normal(k_w, (hidden, hidden), dtype=jnp.float32)
          / jnp.sqrt(jnp.float32(hidden)))
    b0 = jax.random.normal(k_b, (1, hidden), dtype=jnp.float32) * 0.01
    weights = jnp.stack([w0] * layers, axis=0)       # (layers, C, C)
    biases = jnp.stack([b0] * layers, axis=0)        # (layers, 1, C)

    out = topotune_onehasse_forward(x0, x1, x2, edge_index, weights, biases)
    out = {r: jax.block_until_ready(v) for r, v in out.items()}

    assert out[0].shape == (n0, hidden)
    assert out[1].shape == (n1, hidden)
    assert out[2].shape == (n2, hidden)
    assert all(v.dtype == jnp.float32 for v in out.values())

    # Correctness check against a pure-JAX reference with the same precision.
    a_p, x_p, w_p, b_p, _ = _prepare_operands(
        x0, x1, x2, edge_index, weights, biases)
    ref = _reference_forward(a_p, x_p, w_p, b_p, layers)
    ref = ref[: n0 + n1 + n2, :hidden]
    got = jnp.concatenate([out[0], out[1], out[2]], axis=0)
    assert jnp.allclose(got, ref, rtol=1e-2, atol=1e-2), "kernel/reference mismatch"

    print("KERNEL_OK")
</pallas_src>

<mosaic_0001>
module attributes {stable_mosaic.version = 11 : i64} {
  func.func @_topotune_fused_kernel(%arg0: memref<48x48xbf16, #tpu.memory_space<vmem>>, %arg1: memref<48x128xf32, #tpu.memory_space<vmem>>, %arg2: memref<2x128x128xbf16, #tpu.memory_space<vmem>>, %arg3: memref<2x1x128xf32, #tpu.memory_space<vmem>>, %arg4: memref<48x128xf32, #tpu.memory_space<vmem>>) attributes {dimension_semantics = [], scalar_prefetch = 0 : i64, scratch_operands = 0 : i64, tpu.core_type = #tpu.core_type<tc>} {
    %c0 = arith.constant 0 : index
    %c0_0 = arith.constant 0 : index
    %0 = vector.load %arg0[%c0, %c0_0] : memref<48x48xbf16, #tpu.memory_space<vmem>>, vector<48x48xbf16>
    %c0_1 = arith.constant 0 : index
    %c0_2 = arith.constant 0 : index
    %1 = vector.load %arg1[%c0_1, %c0_2] : memref<48x128xf32, #tpu.memory_space<vmem>>, vector<48x128xf32>
    %c0_3 = arith.constant 0 : index
    %c0_4 = arith.constant 0 : index
    %c0_5 = arith.constant 0 : index
    %2 = vector.load %arg2[%c0_3, %c0_4, %c0_5] : memref<2x128x128xbf16, #tpu.memory_space<vmem>>, vector<1x128x128xbf16>
    %3 = vector.shape_cast %2 : vector<1x128x128xbf16> to vector<128x128xbf16>
    %c0_6 = arith.constant 0 : index
    %c0_7 = arith.constant 0 : index
    %c0_8 = arith.constant 0 : index
    %4 = vector.load %arg3[%c0_6, %c0_7, %c0_8] : memref<2x1x128xf32, #tpu.memory_space<vmem>>, vector<1x1x128xf32>
    %5 = vector.shape_cast %4 : vector<1x1x128xf32> to vector<1x128xf32>
    %6 = arith.truncf %1 : vector<48x128xf32> to vector<48x128xbf16>
    %cst = arith.constant dense<0.000000e+00> : vector<48x128xf32>
    %7 = tpu.matmul %6, %3, %cst {dimension_numbers = #tpu.dot_dimension_numbers<[1], [0], [0], [1], [0, 0, 1, 1], [], []>} : vector<48x128xbf16>, vector<128x128xbf16>, vector<48x128xf32> -> vector<48x128xf32>
    %8 = arith.truncf %7 : vector<48x128xf32> to vector<48x128xbf16>
    %cst_9 = arith.constant dense<0.000000e+00> : vector<48x128xf32>
    %9 = tpu.matmul %0, %8, %cst_9 {dimension_numbers = #tpu.dot_dimension_numbers<[1], [0], [0], [1], [0, 0, 1, 1], [], []>} : vector<48x48xbf16>, vector<48x128xbf16>, vector<48x128xf32> -> vector<48x128xf32>
    %10 = arith.addf %9, %7 : vector<48x128xf32>
    %11 = vector.broadcast %5 : vector<1x128xf32> to vector<48x128xf32>
    %12 = arith.addf %10, %11 : vector<48x128xf32>
    %cst_10 = arith.constant 0.000000e+00 : f32
    %13 = vector.broadcast %cst_10 : f32 to vector<48x128xf32>
    %14 = arith.maximumf %12, %13 : vector<48x128xf32>
    %c1 = arith.constant 1 : index
    %c0_11 = arith.constant 0 : index
    %c0_12 = arith.constant 0 : index
    %15 = vector.load %arg2[%c1, %c0_11, %c0_12] : memref<2x128x128xbf16, #tpu.memory_space<vmem>>, vector<1x128x128xbf16>
    %16 = vector.shape_cast %15 : vector<1x128x128xbf16> to vector<128x128xbf16>
    %c1_13 = arith.constant 1 : index
    %c0_14 = arith.constant 0 : index
    %c0_15 = arith.constant 0 : index
    %17 = vector.load %arg3[%c1_13, %c0_14, %c0_15] : memref<2x1x128xf32, #tpu.memory_space<vmem>>, vector<1x1x128xf32>
    %18 = vector.shape_cast %17 : vector<1x1x128xf32> to vector<1x128xf32>
    %19 = arith.truncf %14 : vector<48x128xf32> to vector<48x128xbf16>
    %cst_16 = arith.constant dense<0.000000e+00> : vector<48x128xf32>
    %20 = tpu.matmul %19, %16, %cst_16 {dimension_numbers = #tpu.dot_dimension_numbers<[1], [0], [0], [1], [0, 0, 1, 1], [], []>} : vector<48x128xbf16>, vector<128x128xbf16>, vector<48x128xf32> -> vector<48x128xf32>
    %21 = arith.truncf %20 : vector<48x128xf32> to vector<48x128xbf16>
    %cst_17 = arith.constant dense<0.000000e+00> : vector<48x128xf32>
    %22 = tpu.matmul %0, %21, %cst_17 {dimension_numbers = #tpu.dot_dimension_numbers<[1], [0], [0], [1], [0, 0, 1, 1], [], []>} : vector<48x48xbf16>, vector<48x128xbf16>, vector<48x128xf32> -> vector<48x128xf32>
    %23 = arith.addf %22, %20 : vector<48x128xf32>
    %24 = vector.broadcast %18 : vector<1x128xf32> to vector<48x128xf32>
    %25 = arith.addf %23, %24 : vector<48x128xf32>
    %cst_18 = arith.constant 0.000000e+00 : f32
    %26 = vector.broadcast %cst_18 : f32 to vector<48x128xf32>
    %27 = arith.maximumf %25, %26 : vector<48x128xf32>
    %c0_19 = arith.constant 0 : index
    %c0_20 = arith.constant 0 : index
    %28 = vector.load %arg4[%c0_19, %c0_20] : memref<48x128xf32, #tpu.memory_space<vmem>>, vector<48x128xf32>
    tpu.vector_store %arg4[%c0_19, %c0_20], %27 {strides = array<i32>} : memref<48x128xf32, #tpu.memory_space<vmem>>, vector<48x128xf32>,
    return
  }
}

</mosaic_0001>

<llo_original>
// kernel: tpu_custom_call.1
$region0: #{tpu_custom_call.1}
  #allocation0 [shape = 'u32[]', space=smem, size = 0x4, offset = 0x4, fixed_abs, tag = 'smem constant byte address 0x4 - core index']
  #allocation1 [shape = 'u32[144,128]{1,0:T(1,128)}', space=vmem, size = 0x12000, scoped, tag = 'internal scratch']
  %s0 = inlined_call_operand.hbm [shape: bf16[48,48], index: 0, kind: input, shape index: {}]
  %s1 = inlined_call_operand.hbm [shape: f32[48,128], index: 1, kind: input, shape index: {}]
  %s2 = inlined_call_operand.hbm [shape: bf16[2,128,128], index: 2, kind: input, shape index: {}]
  %s3 = inlined_call_operand.vmem [shape: f32[2,1,128], index: 3, kind: input, shape index: {}]
  %s4 = inlined_call_operand.hbm [shape: f32[48,128], index: 4, kind: output, shape index: {}]
  %s5 = sld [smem:[#allocation0]]
  $region38: #{tpu_custom_call.1} parent=0
    _
  %s7 = ssub.s32 1, %s5
  %s8 = scalar_select 0, %s7, %s5
  $region1: #{tpu_custom_call.1} parent=0
    #allocation2 [shape = 'u8[12288]{0}', space=vmem, size = 0x3000, scoped, tag = 'input window, operand 0, single buffered']
    #allocation3 [shape = 's32[1]{0}', space=sflag, size = 0x4, scoped, tag = 'scoped memory for tpu_custom_call.1']
    #allocation4 [shape = 's32[1]{0}', space=sflag, size = 0x4, scoped, tag = 'scoped memory for tpu_custom_call.1']
    #allocation5 [shape = 'u8[24576]{0}', space=vmem, size = 0x6000, scoped, tag = 'input window, operand 1, single buffered']
    #allocation6 [shape = 's32[1]{0}', space=sflag, size = 0x4, scoped, tag = 'scoped memory for tpu_custom_call.1']
    #allocation7 [shape = 'u8[65536]{0}', space=vmem, size = 0x10000, scoped, tag = 'input window, operand 2, single buffered']
    #allocation8 [shape = 'u8[24576]{0}', space=vmem, size = 0x6000, scoped, tag = 'output window, operand 0, single buffered']
    %9 = vsyncpa [#allocation3], 0
    %10 = vsyncpa [#allocation6], 0
    %11 = vsyncpa [#allocation4], 0
    // Predicated region
    $region2: #{tpu_custom_call.1} parent=1 // pred_check
      _
    $region3: #{tpu_custom_call.1} parent=1 // pred_check_branch
      %13 = sbr.rel (0) target = $region5
    $region4: #{tpu_custom_call.1} parent=1 // pred_region
      %s15 = ssub.s32 384, 384
      %16 = vsyncadd [#allocation3], %s15
      %s17 = sshll.u32 [#allocation2], 4
      %s18 = int_to_ptr.vmem [resolvable:$true] %s17
      %23 = dma.hbm_to_vmem [thread:$0]  %s0, 384, %s18, [#allocation3], 64, 64, 4
    $region5: #{tpu_custom_call.1} parent=1 // pred_fallthru
      _
    // Predicated region
    $region6: #{tpu_custom_call.1} parent=1 // pred_check
      _
    $region7: #{tpu_custom_call.1} parent=1 // pred_check_branch
      %25 = sbr.rel (0) target = $region9
    $region8: #{tpu_custom_call.1} parent=1 // pred_region
      %s27 = ssub.s32 768, 768
      %28 = vsyncadd [#allocation6], %s27
      %s29 = sshll.u32 [#allocation5], 4
      %s30 = int_to_ptr.vmem [resolvable:$true] %s29
      %35 = dma.hbm_to_vmem [thread:$0]  %s1, 768, %s30, [#allocation6], 128, 128, 8
    $region9: #{tpu_custom_call.1} parent=1 // pred_fallthru
      _
    // Predicated region
    $region10: #{tpu_custom_call.1} parent=1 // pred_check
      _
    $region11: #{tpu_custom_call.1} parent=1 // pred_check_branch
      %37 = sbr.rel (0) target = $region13
    $region12: #{tpu_custom_call.1} parent=1 // pred_region
      %s39 = ssub.s32 2048, 2048
      %40 = vsyncadd [#allocation6], %s39
      %s41 = sshll.u32 [#allocation7], 4
      %s42 = int_to_ptr.vmem [resolvable:$true] %s41
      %47 = dma.hbm_to_vmem [thread:$0]  %s2, 2048, %s42, [#allocation6], 64, 64, 4
    $region13: #{tpu_custom_call.1} parent=1 // pred_fallthru
      _
    // Predicated region
    $region14: #{tpu_custom_call.1} parent=1 // pred_check
      _
    $region15: #{tpu_custom_call.1} parent=1 // pred_check_branch
      %49 = sbr.rel (0) target = $region17
    $region16: #{tpu_custom_call.1} parent=1 // pred_region
      _
    $region17: #{tpu_custom_call.1} parent=1 // pred_fallthru
      _
    // Predicated region
    $region18: #{tpu_custom_call.1} parent=1 // pred_check
      _
    $region19: #{tpu_custom_call.1} parent=1 // pred_check_branch
      %51 = sbr.rel (0) target = $region21
    $region20: #{tpu_custom_call.1} parent=1 // pred_region
      %52 = dma.done [#allocation3], 384
    $region21: #{tpu_custom_call.1} parent=1 // pred_fallthru
      _
    // Predicated region
    $region22: #{tpu_custom_call.1} parent=1 // pred_check
      _
    $region23: #{tpu_custom_call.1} parent=1 // pred_check_branch
      %54 = sbr.rel (0) target = $region25
    $region24: #{tpu_custom_call.1} parent=1 // pred_region
      %55 = dma.done [#allocation6], 768
    $region25: #{tpu_custom_call.1} parent=1 // pred_fallthru
      _
    // Predicated region
    $region26: #{tpu_custom_call.1} parent=1 // pred_check
      _
    $region27: #{tpu_custom_call.1} parent=1 // pred_check_branch
      %57 = sbr.rel (0) target = $region29
    $region28: #{tpu_custom_call.1} parent=1 // pred_region
      %58 = dma.done [#allocation6], 2048
    $region29: #{tpu_custom_call.1} parent=1 // pred_fallthru
      _
    %v60 = vld [vmem:[#allocation2] sm:$0xf]
    %v61 = vld [vmem:[#allocation2 + $0x4] sm:$0xf]
    %v62 = vld [vmem:[#allocation2 + $0x8] sm:$0xf]
    %v63 = vld [vmem:[#allocation2 + $0xc] sm:$0xf]
    %v64 = vld [vmem:[#allocation2 + $0x10] sm:$0xf]
    %v65 = vld [vmem:[#allocation2 + $0x14] sm:$0xf]
    %v66 = vld [vmem:[#allocation5] sm:$0xff]
    %v67 = vld [vmem:[#allocation5 + $0x8] sm:$0xff]
    %v68 = vld [vmem:[#allocation5 + $0x10] sm:$0xff]
    %v69 = vld [vmem:[#allocation5 + $0x18] sm:$0xff]
    %v70 = vld [vmem:[#allocation5 + $0x20] sm:$0xff]
    %v71 = vld [vmem:[#allocation5 + $0x28] sm:$0xff]
    %v72 = vld [vmem:[#allocation7] sm:$0xf]
    %v73 = vld [vmem:[#allocation7 + $0x4] sm:$0xf]
    %v74 = vld [vmem:[#allocation7 + $0x8] sm:$0xf]
    %v75 = vld [vmem:[#allocation7 + $0xc] sm:$0xf]
    %v76 = vld [vmem:[#allocation7 + $0x10] sm:$0xf]
    %v77 = vld [vmem:[#allocation7 + $0x14] sm:$0xf]
    %v78 = vld [vmem:[#allocation7 + $0x18] sm:$0xf]
    %v79 = vld [vmem:[#allocation7 + $0x1c] sm:$0xf]
    %v80 = vld [vmem:[#allocation7 + $0x20] sm:$0xf]
    %v81 = vld [vmem:[#allocation7 + $0x24] sm:$0xf]
    %v82 = vld [vmem:[#allocation7 + $0x28] sm:$0xf]
    %v83 = vld [vmem:[#allocation7 + $0x2c] sm:$0xf]
    %v84 = vld [vmem:[#allocation7 + $0x30] sm:$0xf]
    %v85 = vld [vmem:[#allocation7 + $0x34] sm:$0xf]
    %v86 = vld [vmem:[#allocation7 + $0x38] sm:$0xf]
    %v87 = vld [vmem:[#allocation7 + $0x3c] sm:$0xf]
    %v88 = vld [vmem:[%s3] sm:$0x1]
    %v89 = vpack.c.bf16 %v67, %v66
    %v90 = vpack.c.bf16 %v69, %v68
    %v91 = vpack.c.bf16 %v71, %v70
    %v108 = vunpack.c.l.b16 %v72
    %v109 = vunpack.c.l.b16 %v73
    %v110 = vunpack.c.l.b16 %v74
    %v111 = vunpack.c.l.b16 %v75
    %v112 = vunpack.c.l.b16 %v76
    %v113 = vunpack.c.l.b16 %v77
    %v114 = vunpack.c.l.b16 %v78
    %v115 = vunpack.c.l.b16 %v79
    %v116 = vunpack.c.l.b16 %v80
    %v117 = vunpack.c.l.b16 %v81
    %v118 = vunpack.c.l.b16 %v82
    %v119 = vunpack.c.l.b16 %v83
    %v120 = vunpack.c.l.b16 %v84
    %v121 = vunpack.c.l.b16 %v85
    %v122 = vunpack.c.l.b16 %v86
    %v123 = vunpack.c.l.b16 %v87
    %v124 = vpack.c.b16 %v109, %v108
    %v125 = vpack.c.b16 %v111, %v110
    %v126 = vpack.c.b16 %v113, %v112
    %v127 = vpack.c.b16 %v115, %v114
    %v128 = vpack.c.b16 %v117, %v116
    %v129 = vpack.c.b16 %v119, %v118
    %v130 = vpack.c.b16 %v121, %v120
    %v131 = vpack.c.b16 %v123, %v122
    %140 = vmatprep.subr.bf16.mxu0 0
    %141 = vmatpush1.bf16.msra.mxu0 %v124
    %142 = vmatprep.subr.bf16.mxu0 0
    %143 = vmatpush1.bf16.msra.mxu0 %v125
    %144 = vmatprep.subr.bf16.mxu0 0
    %145 = vmatpush1.bf16.msra.mxu0 %v126
    %146 = vmatprep.subr.bf16.mxu0 0
    %147 = vmatpush1.bf16.msra.mxu0 %v127
    %148 = vmatprep.subr.bf16.mxu0 0
    %149 = vmatpush1.bf16.msra.mxu0 %v128
    %150 = vmatprep.subr.bf16.mxu0 0
    %151 = vmatpush1.bf16.msra.mxu0 %v129
    %152 = vmatprep.subr.bf16.mxu0 0
    %153 = vmatpush1.bf16.msra.mxu0 %v130
    %154 = vmatprep.subr.bf16.mxu0 0
    %155 = vmatpush1.bf16.msra.mxu0 %v131
    %156 = vmatprep.subr.bf16.mxu0 0
    %157 = vmatpush1.bf16.msra.mxu0 0
    %158 = vmatprep.subr.bf16.mxu0 0
    %159 = vmatpush1.bf16.msra.mxu0 0
    %160 = vmatprep.subr.bf16.mxu0 0
    %161 = vmatpush1.bf16.msra.mxu0 0
    %162 = vmatprep.subr.bf16.mxu0 0
    %163 = vmatpush1.bf16.msra.mxu0 0
    %164 = vmatprep.subr.bf16.mxu0 0
    %165 = vmatpush1.bf16.msra.mxu0 0
    %166 = vmatprep.subr.bf16.mxu0 0
    %167 = vmatpush1.bf16.msra.mxu0 0
    %168 = vmatprep.subr.bf16.mxu0 0
    %169 = vmatpush1.bf16.msra.mxu0 0
    %170 = vmatprep.subr.bf16.mxu0 0
    %171 = vmatpush1.bf16.msra.mxu0 0
    %172 = vmatprep.mubr.bf16.mxu0 0
    %173 = vmatmul.mubr.bf16.gmra.mrb[0].mxu0 %v89
    %v174 = vpop.f32.mrb[0].mxu0
    %v175 = vadd.f32 0.0, %v174
    %v176 = vpop.f32.mrb[0].mxu0
    %v177 = vpop.f32.mrb[0].mxu0
    %v178 = vadd.f32 0.0, %v177
    %v179 = vpop.f32.mrb[0].mxu0
    %180 = vmatprep.mubr.bf16.mxu0 0
    %181 = vmatmul.mubr.bf16.gmra.mrb[0].mxu0 %v90
    %v182 = vpop.f32.mrb[0].mxu0
    %v183 = vadd.f32 0.0, %v182
    %v184 = vpop.f32.mrb[0].mxu0
    %v185 = vpop.f32.mrb[0].mxu0
    %v186 = vadd.f32 0.0, %v185
    %v187 = vpop.f32.mrb[0].mxu0
    %188 = vmatprep.mubr.bf16.mxu0 0
    %189 = vmatmul.mubr.bf16.gmra.mrb[0].mxu0 %v91
    %v190 = vpop.f32.mrb[0].mxu0
    %v191 = vadd.f32 0.0, %v190
    %v192 = vpop.f32.mrb[0].mxu0
    %v193 = vpop.f32.mrb[0].mxu0
    %v194 = vadd.f32 0.0, %v193
    %v195 = vpop.f32.mrb[0].mxu0
    %196 = vdwg.mxu0
    %v197 = vpack.c.bf16 %v178, %v175
    %v198 = vpack.c.bf16 %v186, %v183
    %v199 = vpack.c.bf16 %v194, %v191
    %v206 = vunpack.c.l.b16 %v60
    %v207 = vunpack.c.l.b16 %v61
    %v208 = vunpack.c.l.b16 %v62
    %v209 = vunpack.c.l.b16 %v63
    %v210 = vunpack.c.l.b16 %v64
    %v211 = vunpack.c.l.b16 %v65
    %v212 = vpack.c.b16 %v207, %v206
    %v213 = vpack.c.b16 %v209, %v208
    %v214 = vpack.c.b16 %v211, %v210
    %vm215 = vcmask 392192
    %v217 = vsel %vm215, %v212, 0
    %v220 = vsel %vm215, %v213, 0
    %v223 = vsel %vm215, %v214, 0
    %225 = vmatprep.subr.bf16.mxu0 0
    %226 = vmatpush1.bf16.msra.mxu0 %v197
    %227 = vmatprep.subr.bf16.mxu0 0
    %228 = vmatpush1.bf16.msra.mxu0 %v198
    %229 = vmatprep.subr.bf16.mxu0 0
    %230 = vmatpush1.bf16.msra.mxu0 %v199
    %231 = vmatprep.subr.bf16.mxu0 0
    %232 = vmatpush1.bf16.msra.mxu0 0
    %233 = vmatprep.subr.bf16.mxu0 0
    %234 = vmatpush1.bf16.msra.mxu0 0
    %235 = vmatprep.subr.bf16.mxu0 0
    %236 = vmatpush1.bf16.msra.mxu0 0
    %237 = vmatprep.subr.bf16.mxu0 0
    %238 = vmatpush1.bf16.msra.mxu0 0
    %239 = vmatprep.subr.bf16.mxu0 0
    %240 = vmatpush1.bf16.msra.mxu0 0
    %241 = vmatprep.subr.bf16.mxu0 0
    %242 = vmatpush1.bf16.msra.mxu0 0
    %243 = vmatprep.subr.bf16.mxu0 0
    %244 = vmatpush1.bf16.msra.mxu0 0
    %245 = vmatprep.subr.bf16.mxu0 0
    %246 = vmatpush1.bf16.msra.mxu0 0
    %247 = vmatprep.subr.bf16.mxu0 0
    %248 = vmatpush1.bf16.msra.mxu0 0
    %249 = vmatprep.subr.bf16.mxu0 0
    %250 = vmatpush1.bf16.msra.mxu0 0
    %251 = vmatprep.subr.bf16.mxu0 0
    %252 = vmatpush1.bf16.msra.mxu0 0
    %253 = vmatprep.subr.bf16.mxu0 0
    %254 = vmatpush1.bf16.msra.mxu0 0
    %255 = vmatprep.subr.bf16.mxu0 0
    %256 = vmatpush1.bf16.msra.mxu0 0
    %257 = vmatprep.mubr.bf16.mxu0 0
    %258 = vmatmul.mubr.bf16.gmra.mrb[0].mxu0 %v217
    %v259 = vpop.f32.mrb[0].mxu0
    %v260 = vadd.f32 %v175, %v259
    %v261 = vpop.f32.mrb[0].mxu0
    %v262 = vpop.f32.mrb[0].mxu0
    %v263 = vadd.f32 %v178, %v262
    %v264 = vpop.f32.mrb[0].mxu0
    %265 = vmatprep.mubr.bf16.mxu0 0
    %266 = vmatmul.mubr.bf16.gmra.mrb[0].mxu0 %v220
    %v267 = vpop.f32.mrb[0].mxu0
    %v268 = vadd.f32 %v183, %v267
    %v269 = vpop.f32.mrb[0].mxu0
    %v270 = vpop.f32.mrb[0].mxu0
    %v271 = vadd.f32 %v186, %v270
    %v272 = vpop.f32.mrb[0].mxu0
    %273 = vmatprep.mubr.bf16.mxu0 0
    %274 = vmatmul.mubr.bf16.gmra.mrb[0].mxu0 %v223
    %v275 = vpop.f32.mrb[0].mxu0
    %v276 = vadd.f32 %v191, %v275
    %v277 = vpop.f32.mrb[0].mxu0
    %v278 = vpop.f32.mrb[0].mxu0
    %v279 = vadd.f32 %v194, %v278
    %v280 = vpop.f32.mrb[0].mxu0
    %281 = vdwg.mxu0
    %v283 = vlaneseq
    %v284 = vshrl.u32 %v283, 7
    %v285 = vsub.s32 0, %v284
    %v286 = vrot.slane %v88, %v285
    %v288 = vadd.f32 %v260, %v286
    %v289 = vadd.f32 %v263, %v286
    %v290 = vadd.f32 %v268, %v286
    %v291 = vadd.f32 %v271, %v286
    %v292 = vadd.f32 %v276, %v286
    %v293 = vadd.f32 %v279, %v286
    %v294 = vmax.f32 %v288, 0.0
    %v295 = vmax.f32 %v289, 0.0
    %v296 = vmax.f32 %v290, 0.0
    %v297 = vmax.f32 %v291, 0.0
    %v298 = vmax.f32 %v292, 0.0
    %v299 = vmax.f32 %v293, 0.0
    %s300 = scalar_lea.vmem [#allocation7], 64
    %v301 = vld [vmem:[%s300] sm:$0xf]
    %v302 = vld [vmem:[%s300 + $0x4] sm:$0xf]
    %v303 = vld [vmem:[%s300 + $0x8] sm:$0xf]
    %v304 = vld [vmem:[%s300 + $0xc] sm:$0xf]
    %v305 = vld [vmem:[%s300 + $0x10] sm:$0xf]
    %v306 = vld [vmem:[%s300 + $0x14] sm:$0xf]
    %v307 = vld [vmem:[%s300 + $0x18] sm:$0xf]
    %v308 = vld [vmem:[%s300 + $0x1c] sm:$0xf]
    %v309 = vld [vmem:[%s300 + $0x20] sm:$0xf]
    %v310 = vld [vmem:[%s300 + $0x24] sm:$0xf]
    %v311 = vld [vmem:[%s300 + $0x28] sm:$0xf]
    %v312 = vld [vmem:[%s300 + $0x2c] sm:$0xf]
    %v313 = vld [vmem:[%s300 + $0x30] sm:$0xf]
    %v314 = vld [vmem:[%s300 + $0x34] sm:$0xf]
    %v315 = vld [vmem:[%s300 + $0x38] sm:$0xf]
    %v316 = vld [vmem:[%s300 + $0x3c] sm:$0xf]
    %s317 = scalar_lea.vmem %s3, 1
    %v318 = vld [vmem:[%s317] sm:$0x1]
    %v319 = vpack.c.bf16 %v295, %v294
    %v320 = vpack.c.bf16 %v297, %v296
    %v321 = vpack.c.bf16 %v299, %v298
    %v338 = vunpack.c.l.b16 %v301
    %v339 = vunpack.c.l.b16 %v302
    %v340 = vunpack.c.l.b16 %v303
    %v341 = vunpack.c.l.b16 %v304
    %v342 = vunpack.c.l.b16 %v305
    %v343 = vunpack.c.l.b16 %v306
    %v344 = vunpack.c.l.b16 %v307
    %v345 = vunpack.c.l.b16 %v308
    %v346 = vunpack.c.l.b16 %v309
    %v347 = vunpack.c.l.b16 %v310
    %v348 = vunpack.c.l.b16 %v311
    %v349 = vunpack.c.l.b16 %v312
    %v350 = vunpack.c.l.b16 %v313
    %v351 = vunpack.c.l.b16 %v314
    %v352 = vunpack.c.l.b16 %v315
    %v353 = vunpack.c.l.b16 %v316
    %v354 = vpack.c.b16 %v339, %v338
    %v355 = vpack.c.b16 %v341, %v340
    %v356 = vpack.c.b16 %v343, %v342
    %v357 = vpack.c.b16 %v345, %v344
    %v358 = vpack.c.b16 %v347, %v346
    %v359 = vpack.c.b16 %v349, %v348
    %v360 = vpack.c.b16 %v351, %v350
    %v361 = vpack.c.b16 %v353, %v352
    %370 = vmatprep.subr.bf16.mxu0 0
    %371 = vmatpush1.bf16.msra.mxu0 %v354
    %372 = vmatprep.subr.bf16.mxu0 0
    %373 = vmatpush1.bf16.msra.mxu0 %v355
    %374 = vmatprep.subr.bf16.mxu0 0
    %375 = vmatpush1.bf16.msra.mxu0 %v356
    %376 = vmatprep.subr.bf16.mxu0 0
    %377 = vmatpush1.bf16.msra.mxu0 %v357
    %378 = vmatprep.subr.bf16.mxu0 0
    %379 = vmatpush1.bf16.msra.mxu0 %v358
    %380 = vmatprep.subr.bf16.mxu0 0
    %381 = vmatpush1.bf16.msra.mxu0 %v359
    %382 = vmatprep.subr.bf16.mxu0 0
    %383 = vmatpush1.bf16.msra.mxu0 %v360
    %384 = vmatprep.subr.bf16.mxu0 0
    %385 = vmatpush1.bf16.msra.mxu0 %v361
    %386 = vmatprep.subr.bf16.mxu0 0
    %387 = vmatpush1.bf16.msra.mxu0 0
    %388 = vmatprep.subr.bf16.mxu0 0
    %389 = vmatpush1.bf16.msra.mxu0 0
    %390 = vmatprep.subr.bf16.mxu0 0
    %391 = vmatpush1.bf16.msra.mxu0 0
    %392 = vmatprep.subr.bf16.mxu0 0
    %393 = vmatpush1.bf16.msra.mxu0 0
    %394 = vmatprep.subr.bf16.mxu0 0
    %395 = vmatpush1.bf16.msra.mxu0 0
    %396 = vmatprep.subr.bf16.mxu0 0
    %397 = vmatpush1.bf16.msra.mxu0 0
    %398 = vmatprep.subr.bf16.mxu0 0
    %399 = vmatpush1.bf16.msra.mxu0 0
    %400 = vmatprep.subr.bf16.mxu0 0
    %401 = vmatpush1.bf16.msra.mxu0 0
    %402 = vmatprep.mubr.bf16.mxu0 0
    %403 = vmatmul.mubr.bf16.gmra.mrb[0].mxu0 %v319
    %v404 = vpop.f32.mrb[0].mxu0
    %v405 = vadd.f32 0.0, %v404
    %v406 = vpop.f32.mrb[0].mxu0
    %v407 = vpop.f32.mrb[0].mxu0
    %v408 = vadd.f32 0.0, %v407
    %v409 = vpop.f32.mrb[0].mxu0
    %410 = vmatprep.mubr.bf16.mxu0 0
    %411 = vmatmul.mubr.bf16.gmra.mrb[0].mxu0 %v320
    %v412 = vpop.f32.mrb[0].mxu0
    %v413 = vadd.f32 0.0, %v412
    %v414 = vpop.f32.mrb[0].mxu0
    %v415 = vpop.f32.mrb[0].mxu0
    %v416 = vadd.f32 0.0, %v415
    %v417 = vpop.f32.mrb[0].mxu0
    %418 = vmatprep.mubr.bf16.mxu0 0
    %419 = vmatmul.mubr.bf16.gmra.mrb[0].mxu0 %v321
    %v420 = vpop.f32.mrb[0].mxu0
    %v421 = vadd.f32 0.0, %v420
    %v422 = vpop.f32.mrb[0].mxu0
    %v423 = vpop.f32.mrb[0].mxu0
    %v424 = vadd.f32 0.0, %v423
    %v425 = vpop.f32.mrb[0].mxu0
    %426 = vdwg.mxu0
    %v427 = vpack.c.bf16 %v408, %v405
    %v428 = vpack.c.bf16 %v416, %v413
    %v429 = vpack.c.bf16 %v424, %v421
    %430 = vmatprep.subr.bf16.mxu0 0
    %431 = vmatpush1.bf16.msra.mxu0 %v427
    %432 = vmatprep.subr.bf16.mxu0 0
    %433 = vmatpush1.bf16.msra.mxu0 %v428
    %434 = vmatprep.subr.bf16.mxu0 0
    %435 = vmatpush1.bf16.msra.mxu0 %v429
    %436 = vmatprep.subr.bf16.mxu0 0
    %437 = vmatpush1.bf16.msra.mxu0 0
    %438 = vmatprep.subr.bf16.mxu0 0
    %439 = vmatpush1.bf16.msra.mxu0 0
    %440 = vmatprep.subr.bf16.mxu0 0
    %441 = vmatpush1.bf16.msra.mxu0 0
    %442 = vmatprep.subr.bf16.mxu0 0
    %443 = vmatpush1.bf16.msra.mxu0 0
    %444 = vmatprep.subr.bf16.mxu0 0
    %445 = vmatpush1.bf16.msra.mxu0 0
    %446 = vmatprep.subr.bf16.mxu0 0
    %447 = vmatpush1.bf16.msra.mxu0 0
    %448 = vmatprep.subr.bf16.mxu0 0
    %449 = vmatpush1.bf16.msra.mxu0 0
    %450 = vmatprep.subr.bf16.mxu0 0
    %451 = vmatpush1.bf16.msra.mxu0 0
    %452 = vmatprep.subr.bf16.mxu0 0
    %453 = vmatpush1.bf16.msra.mxu0 0
    %454 = vmatprep.subr.bf16.mxu0 0
    %455 = vmatpush1.bf16.msra.mxu0 0
    %456 = vmatprep.subr.bf16.mxu0 0
    %457 = vmatpush1.bf16.msra.mxu0 0
    %458 = vmatprep.subr.bf16.mxu0 0
    %459 = vmatpush1.bf16.msra.mxu0 0
    %460 = vmatprep.subr.bf16.mxu0 0
    %461 = vmatpush1.bf16.msra.mxu0 0
    %462 = vmatprep.mubr.bf16.mxu0 0
    %463 = vmatmul.mubr.bf16.gmra.mrb[0].mxu0 %v217
    %v464 = vpop.f32.mrb[0].mxu0
    %v465 = vadd.f32 %v405, %v464
    %v466 = vpop.f32.mrb[0].mxu0
    %v467 = vpop.f32.mrb[0].mxu0
    %v468 = vadd.f32 %v408, %v467
    %v469 = vpop.f32.mrb[0].mxu0
    %470 = vmatprep.mubr.bf16.mxu0 0
    %471 = vmatmul.mubr.bf16.gmra.mrb[0].mxu0 %v220
    %v472 = vpop.f32.mrb[0].mxu0
    %v473 = vadd.f32 %v413, %v472
    %v474 = vpop.f32.mrb[0].mxu0
    %v475 = vpop.f32.mrb[0].mxu0
    %v476 = vadd.f32 %v416, %v475
    %v477 = vpop.f32.mrb[0].mxu0
    %478 = vmatprep.mubr.bf16.mxu0 0
    %479 = vmatmul.mubr.bf16.gmra.mrb[0].mxu0 %v223
    %v480 = vpop.f32.mrb[0].mxu0
    %v481 = vadd.f32 %v421, %v480
    %v482 = vpop.f32.mrb[0].mxu0
    %v483 = vpop.f32.mrb[0].mxu0
    %v484 = vadd.f32 %v424, %v483
    %v485 = vpop.f32.mrb[0].mxu0
    %486 = vdwg.mxu0
    %v488 = vlaneseq
    %v489 = vshrl.u32 %v488, 7
    %v490 = vsub.s32 0, %v489
    %v491 = vrot.slane %v318, %v490
    %v493 = vadd.f32 %v465, %v491
    %v494 = vadd.f32 %v468, %v491
    %v495 = vadd.f32 %v473, %v491
    %v496 = vadd.f32 %v476, %v491
    %v497 = vadd.f32 %v481, %v491
    %v498 = vadd.f32 %v484, %v491
    %v499 = vmax.f32 %v493, 0.0
    %v500 = vmax.f32 %v494, 0.0
    %v501 = vmax.f32 %v495, 0.0
    %v502 = vmax.f32 %v496, 0.0
    %v503 = vmax.f32 %v497, 0.0
    %v504 = vmax.f32 %v498, 0.0
    %505 = vst [vmem:[#allocation8] sm:$0xff] %v499
    %506 = vst [vmem:[#allocation8 + $0x8] sm:$0xff] %v500
    %507 = vst [vmem:[#allocation8 + $0x10] sm:$0xff] %v501
    %508 = vst [vmem:[#allocation8 + $0x18] sm:$0xff] %v502
    %509 = vst [vmem:[#allocation8 + $0x20] sm:$0xff] %v503
    %510 = vst [vmem:[#allocation8 + $0x28] sm:$0xff] %v504
    // Predicated region
    $region30: #{tpu_custom_call.1} parent=1 // pred_check
      _
    $region31: #{tpu_custom_call.1} parent=1 // pred_check_branch
      %512 = sbr.rel (0) target = $region33
    $region32: #{tpu_custom_call.1} parent=1 // pred_region
      %s514 = ssub.s32 768, 768
      %515 = vsyncadd [#allocation4], %s514
      %s516 = sshll.u32 [#allocation8], 4
      %s517 = int_to_ptr.vmem [resolvable:$true] %s516
      %522 = dma.vmem_to_hbm [thread:$0]  %s517, 768, %s4, [#allocation4], 128, 128, 8
    $region33: #{tpu_custom_call.1} parent=1 // pred_fallthru
      _
    // Predicated region
    $region34: #{tpu_custom_call.1} parent=1 // pred_check
      _
    $region35: #{tpu_custom_call.1} parent=1 // pred_check_branch
      %524 = sbr.rel (0) target = $region37
    $region36: #{tpu_custom_call.1} parent=1 // pred_region
      %525 = dma.done [#allocation4], 768
    $region37: #{tpu_custom_call.1} parent=1 // pred_fallthru
      _
    %526 = vsyncpa [#allocation3], 1
    %527 = vsyncpa [#allocation6], 1
    %528 = vsyncpa [#allocation4], 1

</llo_original>
